<compile_context>
chip_gen: v7x
topology: tpu7x:2x2x1
jax: 0.10.0
libtpu: 0.0.40
codegen_flags: <defaults>
</compile_context>

<pallas_src>
import functools

import jax
import jax.numpy as jnp
from jax.experimental import pallas as pl
from jax.experimental.pallas import tpu as pltpu


def _sc_kernel(x_ref, w_ref, b_ref, o_ref, *, ksize):
    """x_ref/o_ref: (1, C, H, W) VMEM block; w_ref: (2*k*k,) f32 SMEM; b_ref: (1,) f32 SMEM."""
    x = x_ref[0]                                   # (C, H, W), input dtype
    C, H, W = x.shape
    pad = (ksize - 1) // 2

    # ---- channel pooling (mean accumulated in f32) ----
    cmax = jnp.max(x, axis=0).astype(jnp.float32)                 # (H, W)
    cmean = jnp.sum(x.astype(jnp.float32), axis=0) * (1.0 / C)    # (H, W)

    # ---- 2-channel k x k cross-correlation with zero padding + bias ----
    pmax = jnp.pad(cmax, ((pad, pad), (pad, pad)))                # (H+2p, W+2p)
    pmean = jnp.pad(cmean, ((pad, pad), (pad, pad)))
    acc = jnp.zeros((H, W), jnp.float32) + b_ref[0]
    for kh in range(ksize):                        # static unroll over k*k taps
        for kw in range(ksize):
            w_max = w_ref[kh * ksize + kw]                     # SMEM scalar (ci=0: max)
            w_mean = w_ref[ksize * ksize + kh * ksize + kw]    # SMEM scalar (ci=1: mean)
            acc = acc + w_max * pmax[kh:kh + H, kw:kw + W] \
                      + w_mean * pmean[kh:kh + H, kw:kw + W]

    scale = jax.nn.sigmoid(acc)                                   # (H, W) f32

    # ---- broadcast over channels; multiply & store in the input dtype ----
    o_ref[0] = (x * scale.astype(x.dtype)[None, :, :]).astype(o_ref.dtype)


def sc_forward(x, conv_weight, conv_bias):
    """x: (B, C, H, W); conv_weight: (1, 2, k, k) (PyTorch Conv2d layout); conv_bias: (1,)."""
    B, C, H, W = x.shape
    ksize = conv_weight.shape[-1]
    assert conv_weight.shape == (1, 2, ksize, ksize)

    w_flat = conv_weight.reshape(-1).astype(jnp.float32)   # (2*k*k,), [ci, kh, kw] order
    b_flat = conv_bias.reshape(-1).astype(jnp.float32)     # (1,)

    # double-buffered input + output per-batch slabs plus headroom; cap for v7x
    block_bytes = C * H * W * x.dtype.itemsize
    vmem_limit = int(min(max(4 * block_bytes + (4 << 20), 32 << 20), 64 << 20))
    # TODO(synk): for very large C*H*W slabs (> ~14 MiB) add an inner spatial
    # tile axis (two-pass pool/scale) instead of one whole-batch block.

    out = pl.pallas_call(
        functools.partial(_sc_kernel, ksize=ksize),
        out_shape=jax.ShapeDtypeStruct((B, C, H, W), x.dtype),
        grid=(B,),
        in_specs=[
            pl.BlockSpec((1, C, H, W), lambda b: (b, 0, 0, 0)),
            pl.BlockSpec(memory_space=pltpu.MemorySpace.SMEM),
            pl.BlockSpec(memory_space=pltpu.MemorySpace.SMEM),
        ],
        out_specs=pl.BlockSpec((1, C, H, W), lambda b: (b, 0, 0, 0)),
        compiler_params=pltpu.CompilerParams(
            dimension_semantics=("parallel",),
            vmem_limit_bytes=vmem_limit,
        ),
    )(x, w_flat, b_flat)
    return out


def reference_sc(x, conv_weight, conv_bias):
    """Pure-JAX reference matching the PyTorch SC.forward."""
    cmax = jnp.max(x, axis=1, keepdims=True)
    cmean = jnp.mean(x, axis=1, keepdims=True)
    comp = jnp.concatenate([cmax, cmean], axis=1)               # (B, 2, H, W)
    y = jax.lax.conv_general_dilated(
        comp, conv_weight, window_strides=(1, 1), padding="SAME",
        dimension_numbers=("NCHW", "OIHW", "NCHW"),
        precision=jax.lax.Precision.HIGHEST)
    y = y + conv_bias.reshape(1, -1, 1, 1)
    return x * jax.nn.sigmoid(y)


if __name__ == "__main__":
    key = jax.random.PRNGKey(0)
    kx, kw, kb = jax.random.split(key, 3)

    B, C, H, W = 2, 4, 16, 16
    kernel_size = 3

    x = jax.random.normal(kx, (B, C, H, W), dtype=jnp.float32)
    # deterministic Conv2d(2, 1, 3, padding=1) parameters (PyTorch layout)
    fan_in = 2 * kernel_size * kernel_size
    bound = 1.0 / (fan_in ** 0.5)
    conv_weight = jax.random.uniform(kw, (1, 2, kernel_size, kernel_size),
                                     jnp.float32, -bound, bound)
    conv_bias = jax.random.uniform(kb, (1,), jnp.float32, -bound, bound)

    out = sc_forward(x, conv_weight, conv_bias)
    out = jax.block_until_ready(out)

    ref = reference_sc(x, conv_weight, conv_bias)
    assert out.shape == x.shape
    assert jnp.allclose(out, ref, atol=1e-5, rtol=1e-5), "mismatch vs reference"

    print("KERNEL_OK")
</pallas_src>

<mosaic_0001>
module attributes {stable_mosaic.version = 11 : i64} {
  func.func @_sc_kernel(%arg0: i32, %arg1: memref<1x4x16x16xf32, #tpu.memory_space<vmem>>, %arg2: memref<18xf32, #tpu.memory_space<smem>>, %arg3: memref<1xf32, #tpu.memory_space<smem>>, %arg4: memref<1x4x16x16xf32, #tpu.memory_space<vmem>>) attributes {dimension_semantics = [#tpu.dimension_semantics<parallel>], iteration_bounds = array<i64: 2>, scalar_prefetch = 0 : i64, scratch_operands = 0 : i64, tpu.core_type = #tpu.core_type<tc>, window_params = [{transform_indices = @transform_0, window_bounds = array<i64: 1, 4, 16, 16>}, {transform_indices = @transform_1, window_bounds = array<i64: 18>}, {transform_indices = @transform_2, window_bounds = array<i64: 1>}, {transform_indices = @transform_3, window_bounds = array<i64: 1, 4, 16, 16>}]} {
    %c0 = arith.constant 0 : index
    %c0_0 = arith.constant 0 : index
    %c0_1 = arith.constant 0 : index
    %c0_2 = arith.constant 0 : index
    %0 = vector.load %arg1[%c0, %c0_0, %c0_1, %c0_2] : memref<1x4x16x16xf32, #tpu.memory_space<vmem>>, vector<1x4x16x16xf32>
    %1 = vector.shape_cast %0 : vector<1x4x16x16xf32> to vector<4x16x16xf32>
    %cst = arith.constant dense<0xFF800000> : vector<16x16xf32>
    %2 = vector.multi_reduction <maximumf>, %1, %cst [0] : vector<4x16x16xf32> to vector<16x16xf32>
    %cst_3 = arith.constant dense<0.000000e+00> : vector<16x16xf32>
    %3 = vector.multi_reduction <add>, %1, %cst_3 [0] : vector<4x16x16xf32> to vector<16x16xf32>
    %cst_4 = arith.constant 2.500000e-01 : f32
    %4 = vector.broadcast %cst_4 : f32 to vector<16x16xf32>
    %5 = arith.mulf %3, %4 : vector<16x16xf32>
    %c0_i32 = arith.constant 0 : i32
    %6 = arith.sitofp %c0_i32 : i32 to f32
    %7 = vector.broadcast %6 : f32 to vector<1x16xf32>
    %8 = tpu.concatenate %7, %2 in 0 : vector<1x16xf32>, vector<16x16xf32> -> vector<17x16xf32>
    %9 = vector.broadcast %6 : f32 to vector<1x16xf32>
    %10 = tpu.concatenate %8, %9 in 0 : vector<17x16xf32>, vector<1x16xf32> -> vector<18x16xf32>
    %11 = vector.broadcast %6 : f32 to vector<18x1xf32>
    %12 = tpu.concatenate %11, %10 in 1 : vector<18x1xf32>, vector<18x16xf32> -> vector<18x17xf32>
    %13 = vector.broadcast %6 : f32 to vector<18x1xf32>
    %14 = tpu.concatenate %12, %13 in 1 : vector<18x17xf32>, vector<18x1xf32> -> vector<18x18xf32>
    %c0_i32_5 = arith.constant 0 : i32
    %15 = arith.sitofp %c0_i32_5 : i32 to f32
    %16 = vector.broadcast %15 : f32 to vector<1x16xf32>
    %17 = tpu.concatenate %16, %5 in 0 : vector<1x16xf32>, vector<16x16xf32> -> vector<17x16xf32>
    %18 = vector.broadcast %15 : f32 to vector<1x16xf32>
    %19 = tpu.concatenate %17, %18 in 0 : vector<17x16xf32>, vector<1x16xf32> -> vector<18x16xf32>
    %20 = vector.broadcast %15 : f32 to vector<18x1xf32>
    %21 = tpu.concatenate %20, %19 in 1 : vector<18x1xf32>, vector<18x16xf32> -> vector<18x17xf32>
    %22 = vector.broadcast %15 : f32 to vector<18x1xf32>
    %23 = tpu.concatenate %21, %22 in 1 : vector<18x17xf32>, vector<18x1xf32> -> vector<18x18xf32>
    %cst_6 = arith.constant 0.000000e+00 : f32
    %24 = vector.broadcast %cst_6 : f32 to vector<16x16xf32>
    %c0_7 = arith.constant 0 : index
    %25 = memref.load %arg3[%c0_7] : memref<1xf32, #tpu.memory_space<smem>>
    %26 = vector.broadcast %25 : f32 to vector<16x16xf32>
    %27 = arith.addf %24, %26 : vector<16x16xf32>
    %c0_8 = arith.constant 0 : index
    %28 = memref.load %arg2[%c0_8] : memref<18xf32, #tpu.memory_space<smem>>
    %c9 = arith.constant 9 : index
    %29 = memref.load %arg2[%c9] : memref<18xf32, #tpu.memory_space<smem>>
    %30 = vector.extract_strided_slice %14 {offsets = [0, 0], sizes = [16, 16], strides = [1, 1]} : vector<18x18xf32> to vector<16x16xf32>
    %31 = vector.broadcast %28 : f32 to vector<16x16xf32>
    %32 = arith.mulf %31, %30 : vector<16x16xf32>
    %33 = arith.addf %27, %32 : vector<16x16xf32>
    %34 = vector.extract_strided_slice %23 {offsets = [0, 0], sizes = [16, 16], strides = [1, 1]} : vector<18x18xf32> to vector<16x16xf32>
    %35 = vector.broadcast %29 : f32 to vector<16x16xf32>
    %36 = arith.mulf %35, %34 : vector<16x16xf32>
    %37 = arith.addf %33, %36 : vector<16x16xf32>
    %c1 = arith.constant 1 : index
    %38 = memref.load %arg2[%c1] : memref<18xf32, #tpu.memory_space<smem>>
    %c10 = arith.constant 10 : index
    %39 = memref.load %arg2[%c10] : memref<18xf32, #tpu.memory_space<smem>>
    %40 = vector.extract_strided_slice %14 {offsets = [0, 1], sizes = [16, 16], strides = [1, 1]} : vector<18x18xf32> to vector<16x16xf32>
    %41 = vector.broadcast %38 : f32 to vector<16x16xf32>
    %42 = arith.mulf %41, %40 : vector<16x16xf32>
    %43 = arith.addf %37, %42 : vector<16x16xf32>
    %44 = vector.extract_strided_slice %23 {offsets = [0, 1], sizes = [16, 16], strides = [1, 1]} : vector<18x18xf32> to vector<16x16xf32>
    %45 = vector.broadcast %39 : f32 to vector<16x16xf32>
    %46 = arith.mulf %45, %44 : vector<16x16xf32>
    %47 = arith.addf %43, %46 : vector<16x16xf32>
    %c2 = arith.constant 2 : index
    %48 = memref.load %arg2[%c2] : memref<18xf32, #tpu.memory_space<smem>>
    %c11 = arith.constant 11 : index
    %49 = memref.load %arg2[%c11] : memref<18xf32, #tpu.memory_space<smem>>
    %50 = vector.extract_strided_slice %14 {offsets = [0, 2], sizes = [16, 16], strides = [1, 1]} : vector<18x18xf32> to vector<16x16xf32>
    %51 = vector.broadcast %48 : f32 to vector<16x16xf32>
    %52 = arith.mulf %51, %50 : vector<16x16xf32>
    %53 = arith.addf %47, %52 : vector<16x16xf32>
    %54 = vector.extract_strided_slice %23 {offsets = [0, 2], sizes = [16, 16], strides = [1, 1]} : vector<18x18xf32> to vector<16x16xf32>
    %55 = vector.broadcast %49 : f32 to vector<16x16xf32>
    %56 = arith.mulf %55, %54 : vector<16x16xf32>
    %57 = arith.addf %53, %56 : vector<16x16xf32>
    %c3 = arith.constant 3 : index
    %58 = memref.load %arg2[%c3] : memref<18xf32, #tpu.memory_space<smem>>
    %c12 = arith.constant 12 : index
    %59 = memref.load %arg2[%c12] : memref<18xf32, #tpu.memory_space<smem>>
    %60 = vector.extract_strided_slice %14 {offsets = [1, 0], sizes = [16, 16], strides = [1, 1]} : vector<18x18xf32> to vector<16x16xf32>
    %61 = vector.broadcast %58 : f32 to vector<16x16xf32>
    %62 = arith.mulf %61, %60 : vector<16x16xf32>
    %63 = arith.addf %57, %62 : vector<16x16xf32>
    %64 = vector.extract_strided_slice %23 {offsets = [1, 0], sizes = [16, 16], strides = [1, 1]} : vector<18x18xf32> to vector<16x16xf32>
    %65 = vector.broadcast %59 : f32 to vector<16x16xf32>
    %66 = arith.mulf %65, %64 : vector<16x16xf32>
    %67 = arith.addf %63, %66 : vector<16x16xf32>
    %c4 = arith.constant 4 : index
    %68 = memref.load %arg2[%c4] : memref<18xf32, #tpu.memory_space<smem>>
    %c13 = arith.constant 13 : index
    %69 = memref.load %arg2[%c13] : memref<18xf32, #tpu.memory_space<smem>>
    %70 = vector.extract_strided_slice %14 {offsets = [1, 1], sizes = [16, 16], strides = [1, 1]} : vector<18x18xf32> to vector<16x16xf32>
    %71 = vector.broadcast %68 : f32 to vector<16x16xf32>
    %72 = arith.mulf %71, %70 : vector<16x16xf32>
    %73 = arith.addf %67, %72 : vector<16x16xf32>
    %74 = vector.extract_strided_slice %23 {offsets = [1, 1], sizes = [16, 16], strides = [1, 1]} : vector<18x18xf32> to vector<16x16xf32>
    %75 = vector.broadcast %69 : f32 to vector<16x16xf32>
    %76 = arith.mulf %75, %74 : vector<16x16xf32>
    %77 = arith.addf %73, %76 : vector<16x16xf32>
    %c5 = arith.constant 5 : index
    %78 = memref.load %arg2[%c5] : memref<18xf32, #tpu.memory_space<smem>>
    %c14 = arith.constant 14 : index
    %79 = memref.load %arg2[%c14] : memref<18xf32, #tpu.memory_space<smem>>
    %80 = vector.extract_strided_slice %14 {offsets = [1, 2], sizes = [16, 16], strides = [1, 1]} : vector<18x18xf32> to vector<16x16xf32>
    %81 = vector.broadcast %78 : f32 to vector<16x16xf32>
    %82 = arith.mulf %81, %80 : vector<16x16xf32>
    %83 = arith.addf %77, %82 : vector<16x16xf32>
    %84 = vector.extract_strided_slice %23 {offsets = [1, 2], sizes = [16, 16], strides = [1, 1]} : vector<18x18xf32> to vector<16x16xf32>
    %85 = vector.broadcast %79 : f32 to vector<16x16xf32>
    %86 = arith.mulf %85, %84 : vector<16x16xf32>
    %87 = arith.addf %83, %86 : vector<16x16xf32>
    %c6 = arith.constant 6 : index
    %88 = memref.load %arg2[%c6] : memref<18xf32, #tpu.memory_space<smem>>
    %c15 = arith.constant 15 : index
    %89 = memref.load %arg2[%c15] : memref<18xf32, #tpu.memory_space<smem>>
    %90 = vector.extract_strided_slice %14 {offsets = [2, 0], sizes = [16, 16], strides = [1, 1]} : vector<18x18xf32> to vector<16x16xf32>
    %91 = vector.broadcast %88 : f32 to vector<16x16xf32>
    %92 = arith.mulf %91, %90 : vector<16x16xf32>
    %93 = arith.addf %87, %92 : vector<16x16xf32>
    %94 = vector.extract_strided_slice %23 {offsets = [2, 0], sizes = [16, 16], strides = [1, 1]} : vector<18x18xf32> to vector<16x16xf32>
    %95 = vector.broadcast %89 : f32 to vector<16x16xf32>
    %96 = arith.mulf %95, %94 : vector<16x16xf32>
    %97 = arith.addf %93, %96 : vector<16x16xf32>
    %c7 = arith.constant 7 : index
    %98 = memref.load %arg2[%c7] : memref<18xf32, #tpu.memory_space<smem>>
    %c16 = arith.constant 16 : index
    %99 = memref.load %arg2[%c16] : memref<18xf32, #tpu.memory_space<smem>>
    %100 = vector.extract_strided_slice %14 {offsets = [2, 1], sizes = [16, 16], strides = [1, 1]} : vector<18x18xf32> to vector<16x16xf32>
    %101 = vector.broadcast %98 : f32 to vector<16x16xf32>
    %102 = arith.mulf %101, %100 : vector<16x16xf32>
    %103 = arith.addf %97, %102 : vector<16x16xf32>
    %104 = vector.extract_strided_slice %23 {offsets = [2, 1], sizes = [16, 16], strides = [1, 1]} : vector<18x18xf32> to vector<16x16xf32>
    %105 = vector.broadcast %99 : f32 to vector<16x16xf32>
    %106 = arith.mulf %105, %104 : vector<16x16xf32>
    %107 = arith.addf %103, %106 : vector<16x16xf32>
    %c8 = arith.constant 8 : index
    %108 = memref.load %arg2[%c8] : memref<18xf32, #tpu.memory_space<smem>>
    %c17 = arith.constant 17 : index
    %109 = memref.load %arg2[%c17] : memref<18xf32, #tpu.memory_space<smem>>
    %110 = vector.extract_strided_slice %14 {offsets = [2, 2], sizes = [16, 16], strides = [1, 1]} : vector<18x18xf32> to vector<16x16xf32>
    %111 = vector.broadcast %108 : f32 to vector<16x16xf32>
    %112 = arith.mulf %111, %110 : vector<16x16xf32>
    %113 = arith.addf %107, %112 : vector<16x16xf32>
    %114 = vector.extract_strided_slice %23 {offsets = [2, 2], sizes = [16, 16], strides = [1, 1]} : vector<18x18xf32> to vector<16x16xf32>
    %115 = vector.broadcast %109 : f32 to vector<16x16xf32>
    %116 = arith.mulf %115, %114 : vector<16x16xf32>
    %117 = arith.addf %113, %116 : vector<16x16xf32>
    %118 = arith.negf %117 : vector<16x16xf32>
    %119 = math.exp %118 : vector<16x16xf32>
    %cst_9 = arith.constant 1.000000e+00 : f32
    %120 = vector.broadcast %cst_9 : f32 to vector<16x16xf32>
    %121 = arith.addf %120, %119 : vector<16x16xf32>
    %122 = arith.divf %120, %121 : vector<16x16xf32>
    %123 = vector.shape_cast %122 : vector<16x16xf32> to vector<1x16x16xf32>
    %124 = vector.broadcast %123 : vector<1x16x16xf32> to vector<4x16x16xf32>
    %125 = arith.mulf %1, %124 : vector<4x16x16xf32>
    %c0_10 = arith.constant 0 : index
    %c0_11 = arith.constant 0 : index
    %c0_12 = arith.constant 0 : index
    %c0_13 = arith.constant 0 : index
    %126 = vector.load %arg4[%c0_10, %c0_11, %c0_12, %c0_13] : memref<1x4x16x16xf32, #tpu.memory_space<vmem>>, vector<1x4x16x16xf32>
    %127 = vector.shape_cast %126 : vector<1x4x16x16xf32> to vector<4x16x16xf32>
    %128 = vector.shape_cast %125 : vector<4x16x16xf32> to vector<1x4x16x16xf32>
    tpu.vector_store %arg4[%c0_10, %c0_11, %c0_12, %c0_13], %128 {strides = array<i32>} : memref<1x4x16x16xf32, #tpu.memory_space<vmem>>, vector<1x4x16x16xf32>,
    return
  }
  func.func @transform_0(%arg0: i32) -> (i32, i32, i32, i32) {
    %c0_i32 = arith.constant 0 : i32
    %c0_i32_0 = arith.constant 0 : i32
    %c0_i32_1 = arith.constant 0 : i32
    %c0_i32_2 = arith.constant 0 : i32
    return %arg0, %c0_i32, %c0_i32_0, %c0_i32_1 : i32, i32, i32, i32
  }
  func.func @transform_1(%arg0: i32) -> i32 {
    %c0_i32 = arith.constant 0 : i32
    %c0_i32_0 = arith.constant 0 : i32
    return %c0_i32 : i32
  }
  func.func @transform_2(%arg0: i32) -> i32 {
    %c0_i32 = arith.constant 0 : i32
    %c0_i32_0 = arith.constant 0 : i32
    return %c0_i32 : i32
  }
  func.func @transform_3(%arg0: i32) -> (i32, i32, i32, i32) {
    %c0_i32 = arith.constant 0 : i32
    %c0_i32_0 = arith.constant 0 : i32
    %c0_i32_1 = arith.constant 0 : i32
    %c0_i32_2 = arith.constant 0 : i32
    return %arg0, %c0_i32, %c0_i32_0, %c0_i32_1 : i32, i32, i32, i32
  }
}

</mosaic_0001>

<llo_original>
// kernel: tpu_custom_call.1
$region0: #{tpu_custom_call.1}
  #allocation0 [shape = 'u32[]', space=smem, size = 0x4, offset = 0x4, fixed_abs, tag = 'smem constant byte address 0x4 - core index']
  #allocation1 [shape = 'u32[144,128]{1,0:T(1,128)}', space=vmem, size = 0x12000, scoped, tag = 'internal scratch']
  #allocation2 [shape = 'f32[1]{0:T(128)S(6)}', space=smem, size = 0x200, scoped, tag = 'scoped memory for tpu_custom_call.1']
  %s0 = inlined_call_operand.hbm [shape: f32[2,4,16,16], index: 0, kind: input, shape index: {}]
  %s1 = inlined_call_operand.vmem [shape: f32[18], index: 1, kind: input, shape index: {}]
  %s2 = inlined_call_operand.<no memory space> [shape: f32[1], index: 2, kind: input, shape index: {}]
  %s3 = inlined_call_operand.hbm [shape: f32[2,4,16,16], index: 3, kind: output, shape index: {}]
  %s4 = sld [smem:[#allocation0]]
  $region53: #{tpu_custom_call.1} parent=0
    _
  %s6 = ssub.s32 1, %s4
  %s7 = scalar_select 0, %s6, %s4
  %8 = sst [smem:[#allocation2]] %s2
  $region1: #{tpu_custom_call.1} parent=0
    #allocation3 [shape = 'u8[65536]{0}', space=vmem, size = 0x10000, scoped, tag = 'input window, operand 0']
    #allocation4 [shape = 's32[2]{0}', space=sflag, size = 0x8, scoped, tag = 'scoped memory for tpu_custom_call.1']
    #allocation5 [shape = 's32[2]{0}', space=sflag, size = 0x8, scoped, tag = 'scoped memory for tpu_custom_call.1']
    #allocation6 [shape = 's32[2]{0}', space=sflag, size = 0x8, scoped, tag = 'scoped memory for tpu_custom_call.1']
    #allocation7 [shape = 'u8[512]{0}', space=smem, size = 0x200, scoped, tag = 'input window, operand 1, single buffered']
    #allocation8 [shape = 'u8[65536]{0}', space=vmem, size = 0x10000, scoped, tag = 'output window, operand 0']
    %9 = vsyncpa [#allocation4], 0
    %s10 = scalar_lea.sflag [#allocation4], 1
    %11 = vsyncpa %s10, 0
    %12 = vsyncpa [#allocation6], 0
    %13 = vsyncpa [#allocation5], 0
    %s14 = scalar_lea.sflag [#allocation5], 1
    %15 = vsyncpa %s14, 0
    loop: start=0, step=1, limit=4
    $region2: #{tpu_custom_call.1} parent=1 // loop_pre_header
      _
    $region3: #{tpu_custom_call.1} parent=1 // loop_header
      %s17 = sphi 0, %s21
      %p18 = scmp.ge.s32.totalorder %s17, 4
      %s27 = sphi 0, %s29
      %s30 = sphi 0, %s27
      %s31 = sphi 0, %s30
      %s47 = sphi 0, %s31
      %s51 = sphi 0, %s51
      %s53 = sphi 0, %s51
      %s54 = sphi 0, %s53
      %s68 = sphi 0, %s54
      %s72 = sphi 0, %s72
      %s74 = sphi 0, %s72
      %s75 = sphi 0, %s74
      %s89 = sphi 0, %s75
      %s95 = sphi 0, %s97
      %s98 = sphi 0, %s95
      %s99 = sphi 0, %s98
      %s115 = sphi 0, %s99
    $region4: #{tpu_custom_call.1} parent=1 // loop_header_branch
      %20 = sbr.rel (%p18) target = $region8
    $region5: #{tpu_custom_call.1} parent=1 // loop_body
      %s22 = ssub.s32 %s17, 1
      %s23 = ssub.s32 %s17, 2
      %s24 = sadd.s32 %s17, 1
      %s25 = ssub.s32 %s17, %s24
      %p26 = scmp.eq.s32.totalorder %s25, 0
      %s28 = sadd.s32 %s27, 1
      %s29 = scalar_select %p26, %s27, %s28
      %p32 = pneg %p26
      %p33 = scmp.eq.s32.totalorder %s17, 1
      %p34 = por %p32, %p33
      %p35 = scmp.ne.s32.totalorder %s27, %s30
      %p36 = scmp.eq.s32.totalorder %s17, 0
      %p37 = por %p35, %p36
      %p38 = scmp.ne.s32.totalorder %s27, %s30
      %p39 = scmp.eq.s32.totalorder %s22, 1
      %p40 = por %p38, %p39
      %p41 = scmp.ne.s32.totalorder %s30, %s31
      %p42 = scmp.eq.s32.totalorder %s22, 0
      %p43 = por %p41, %p42
      %p44 = scmp.ne.s32.totalorder %s30, %s31
      %p45 = scmp.eq.s32.totalorder %s23, 1
      %p46 = por %p44, %p45
      %p48 = scmp.ne.s32.totalorder %s31, %s47
      %p49 = scmp.eq.s32.totalorder %s23, 0
      %p50 = por %p48, %p49
      %s52 = sadd.s32 %s51, 1
      %p55 = scmp.eq.s32.totalorder %s17, 1
      %p56 = scmp.ne.s32.totalorder %s51, %s53
      %p57 = scmp.eq.s32.totalorder %s17, 0
      %p58 = por %p56, %p57
      %p59 = scmp.ne.s32.totalorder %s51, %s53
      %p60 = scmp.eq.s32.totalorder %s22, 1
      %p61 = por %p59, %p60
      %p62 = scmp.ne.s32.totalorder %s53, %s54
      %p63 = scmp.eq.s32.totalorder %s22, 0
      %p64 = por %p62, %p63
      %p65 = scmp.ne.s32.totalorder %s53, %s54
      %p66 = scmp.eq.s32.totalorder %s23, 1
      %p67 = por %p65, %p66
      %p69 = scmp.ne.s32.totalorder %s54, %s68
      %p70 = scmp.eq.s32.totalorder %s23, 0
      %p71 = por %p69, %p70
      %s73 = sadd.s32 %s72, 1
      %p76 = scmp.eq.s32.totalorder %s17, 1
      %p77 = scmp.ne.s32.totalorder %s72, %s74
      %p78 = scmp.eq.s32.totalorder %s17, 0
      %p79 = por %p77, %p78
      %p80 = scmp.ne.s32.totalorder %s72, %s74
      %p81 = scmp.eq.s32.totalorder %s22, 1
      %p82 = por %p80, %p81
      %p83 = scmp.ne.s32.totalorder %s74, %s75
      %p84 = scmp.eq.s32.totalorder %s22, 0
      %p85 = por %p83, %p84
      %p86 = scmp.ne.s32.totalorder %s74, %s75
      %p87 = scmp.eq.s32.totalorder %s23, 1
      %p88 = por %p86, %p87
      %p90 = scmp.ne.s32.totalorder %s75, %s89
      %p91 = scmp.eq.s32.totalorder %s23, 0
      %p92 = por %p90, %p91
      %s93 = ssub.s32 %s17, %s24
      %p94 = scmp.eq.s32.totalorder %s93, 0
      %s96 = sadd.s32 %s95, 1
      %s97 = scalar_select %p94, %s95, %s96
      %p100 = pneg %p94
      %p101 = scmp.eq.s32.totalorder %s17, 1
      %p102 = por %p100, %p101
      %p103 = scmp.ne.s32.totalorder %s95, %s98
      %p104 = scmp.eq.s32.totalorder %s17, 0
      %p105 = por %p103, %p104
      %p106 = scmp.ne.s32.totalorder %s95, %s98
      %p107 = scmp.eq.s32.totalorder %s22, 1
      %p108 = por %p106, %p107
      %p109 = scmp.ne.s32.totalorder %s98, %s99
      %p110 = scmp.eq.s32.totalorder %s22, 0
      %p111 = por %p109, %p110
      %p112 = scmp.ne.s32.totalorder %s98, %s99
      %p113 = scmp.eq.s32.totalorder %s23, 1
      %p114 = por %p112, %p113
      %p116 = scmp.ne.s32.totalorder %s99, %s115
      %p117 = scmp.eq.s32.totalorder %s23, 0
      %p118 = por %p116, %p117
      %p119 = scmp.le.s32.totalorder 1, %s17
      %p120 = scmp.lt.s32.totalorder %s17, 3
      %p121 = pnand %p119, %p120
      %p122 = pneg %p121
      // Predicated region
      $region9: #{tpu_custom_call.1} parent=5 // pred_check
        _
      $region10: #{tpu_custom_call.1} parent=5 // pred_check_branch
        %124 = sbr.rel (%p121) target = $region12
      $region11: #{tpu_custom_call.1} parent=5 // pred_region
        %s125 = ssub.s32 %s17, 1
        // Predicated region
        $region13: #{tpu_custom_call.1} parent=11 // pred_check
          %p126 = pneg %p64
        $region14: #{tpu_custom_call.1} parent=11 // pred_check_branch
          %128 = sbr.rel (%p126) target = $region16
        $region15: #{tpu_custom_call.1} parent=11 // pred_region
          %s130 = ssub.s32 16, 16
          %131 = vsyncadd [#allocation6], %s130
          %s133 = sshll.u32 %s1, 4
          %s134 = int_to_ptr.vmem [resolvable:$true] %s133
          %136 = dma.vmem_to_smem %s134, 16, [#allocation7], [#allocation6]
        $region16: #{tpu_custom_call.1} parent=11 // pred_fallthru
          _
        // Predicated region
        $region17: #{tpu_custom_call.1} parent=11 // pred_check
          %p137 = pneg %p85
        $region18: #{tpu_custom_call.1} parent=11 // pred_check_branch
          %139 = sbr.rel (%p137) target = $region20
        $region19: #{tpu_custom_call.1} parent=11 // pred_region
          _
        $region20: #{tpu_custom_call.1} parent=11 // pred_fallthru
          _
      $region12: #{tpu_custom_call.1} parent=5 // pred_fallthru
        _
      %p140 = scmp.lt.s32.totalorder %s17, 2
      // Predicated region
      $region21: #{tpu_custom_call.1} parent=5 // pred_check
        %p141 = pneg %p140
      $region22: #{tpu_custom_call.1} parent=5 // pred_check_branch
        %143 = sbr.rel (%p141) target = $region24
      $region23: #{tpu_custom_call.1} parent=5 // pred_region
        // Predicated region
        $region25: #{tpu_custom_call.1} parent=23 // pred_check
          %p144 = pneg %p37
        $region26: #{tpu_custom_call.1} parent=23 // pred_check_branch
          %146 = sbr.rel (%p144) target = $region28
        $region27: #{tpu_custom_call.1} parent=23 // pred_region
          %s147 = sand.u32 %s27, 1
          %s148 = scalar_lea.sflag [#allocation4], %s147
          %s149 = sand.u32 %s27, 1
          %s150 = smul.addr %s149, 64
          %s151 = scalar_lea.vmem [#allocation3], %s150
          %s153 = ssub.s32 1024, 1024
          %154 = vsyncadd %s148, %s153
          %s155 = smul.addr %s17, 8
          %s156 = smul.addr %s155, 128
          %s157 = scalar_lea.hbm %s0, %s156
          %s158 = sshll.u32 %s151, 4
          %s159 = int_to_ptr.vmem [resolvable:$true] %s158
          %164 = dma.hbm_to_vmem [thread:$0]  %s157, 1024, %s159, %s148, 128, 128, 8
        $region28: #{tpu_custom_call.1} parent=23 // pred_fallthru
          _
      $region24: #{tpu_custom_call.1} parent=5 // pred_fallthru
        _
      %p165 = scmp.le.s32.totalorder 1, %s17
      %p166 = scmp.lt.s32.totalorder %s17, 3
      %p167 = pnand %p165, %p166
      %p168 = pneg %p167
      // Predicated region
      $region29: #{tpu_custom_call.1} parent=5 // pred_check
        _
      $region30: #{tpu_custom_call.1} parent=5 // pred_check_branch
        %170 = sbr.rel (%p167) target = $region32
      $region31: #{tpu_custom_call.1} parent=5 // pred_region
        %s171 = ssub.s32 %s17, 1
        %s172 = sand.u32 %s30, 1
        %s173 = scalar_lea.sflag [#allocation4], %s172
        %s174 = sand.u32 %s30, 1
        %s175 = smul.addr %s174, 64
        %s176 = scalar_lea.vmem [#allocation3], %s175
        // Predicated region
        $region33: #{tpu_custom_call.1} parent=31 // pred_check
          %p177 = pneg %p43
        $region34: #{tpu_custom_call.1} parent=31 // pred_check_branch
          %179 = sbr.rel (%p177) target = $region36
        $region35: #{tpu_custom_call.1} parent=31 // pred_region
          %180 = dma.done %s173, 1024
        $region36: #{tpu_custom_call.1} parent=31 // pred_fallthru
          _
        // Predicated region
        $region37: #{tpu_custom_call.1} parent=31 // pred_check
          %p181 = pneg %p64
        $region38: #{tpu_custom_call.1} parent=31 // pred_check_branch
          %183 = sbr.rel (%p181) target = $region40
        $region39: #{tpu_custom_call.1} parent=31 // pred_region
          %184 = dma.done [#allocation6], 16
        $region40: #{tpu_custom_call.1} parent=31 // pred_fallthru
          _
        %185 = sfence
        %s186 = sand.u32 %s30, 1
        %s187 = scalar_lea.sflag [#allocation4], %s186
        %s188 = sand.u32 %s30, 1
        %s189 = smul.addr %s188, 64
        %s190 = scalar_lea.vmem [#allocation3], %s189
        %p191 = pneg %p43
        %p192 = pneg %p40
        %p193 = pneg %p64
        %p194 = pneg %p61
        %p195 = pneg %p85
        %p196 = pneg %p82
        %p197 = pneg %p111
        %p198 = pneg %p108
        %s199 = sand.u32 %s98, 1
        %s200 = scalar_lea.sflag [#allocation5], %s199
        %s201 = sand.u32 %s98, 1
        %s202 = smul.addr %s201, 64
        %s203 = scalar_lea.vmem [#allocation8], %s202
        %v204 = vld [vmem:[%s176] sm:$0xff]
        %v205 = vld [vmem:[%s176 + $0x8] sm:$0xff]
        %v206 = vld [vmem:[%s176 + $0x10] sm:$0xff]
        %v207 = vld [vmem:[%s176 + $0x18] sm:$0xff]
        %v208 = vld [vmem:[%s176 + $0x20] sm:$0xff]
        %v209 = vld [vmem:[%s176 + $0x28] sm:$0xff]
        %v210 = vld [vmem:[%s176 + $0x30] sm:$0xff]
        %v211 = vld [vmem:[%s176 + $0x38] sm:$0xff]
        %vm212 = vcmask 130048
        %v213 = vsel %vm212, %v204, -inf
        %v214 = vsel %vm212, %v206, -inf
        %v215 = vsel %vm212, %v208, -inf
        %v216 = vmax.f32 %v213, %v215
        %v217 = vsel %vm212, %v210, -inf
        %v218 = vmax.f32 %v214, %v217
        %v219 = vmax.f32 %v216, %v218
        %v220 = vsel %vm212, %v205, -inf
        %v221 = vsel %vm212, %v207, -inf
        %v222 = vsel %vm212, %v209, -inf
        %v223 = vmax.f32 %v220, %v222
        %v224 = vsel %vm212, %v211, -inf
        %v225 = vmax.f32 %v221, %v224
        %v226 = vmax.f32 %v223, %v225
        %v227 = vsel %vm212, %v204, 0.0
        %v228 = vsel %vm212, %v206, 0.0
        %v229 = vadd.f32 %v227, %v228
        %v230 = vsel %vm212, %v208, 0.0
        %v231 = vadd.f32 %v229, %v230
        %v232 = vsel %vm212, %v210, 0.0
        %v233 = vadd.f32 %v231, %v232
        %v234 = vsel %vm212, %v205, 0.0
        %v235 = vsel %vm212, %v207, 0.0
        %v236 = vadd.f32 %v234, %v235
        %v237 = vsel %vm212, %v209, 0.0
        %v238 = vadd.f32 %v236, %v237
        %v239 = vsel %vm212, %v211, 0.0
        %v240 = vadd.f32 %v238, %v239
        %v241 = vmul.f32 %v233, 0.25
        %v242 = vmul.f32 %v240, 0.25
        %vm245 = vcmask 1040384
        %v246 = vrot.slane %v219, 7
        %v247 = vrot.slane %v226, 7
        %v248 = vsel %vm245, %v246, %v247
        %v251 = vsel %vm245, 0.0, %v246
        %v252 = vsel %vm245, %v247, 0.0
        %255 = vrot.lane.b32.xlu0 %v251, 1
        %v256 = vpop.permute.xlu0 %255
        %257 = vrot.lane.b32.xlu0 %v248, 1
        %v258 = vpop.permute.xlu0 %257
        %259 = vrot.lane.b32.xlu0 %v252, 1
        %v260 = vpop.permute.xlu0 %259
        %vm264 = vcmask 7168
        %v265 = vsel %vm264, 0.0, %v256
        %v266 = vsel %vm264, 0.0, %v258
        %v267 = vsel %vm264, 0.0, %v260
        %vm268 = vcmask 138240
        %v269 = vsel %vm268, %v265, 0.0
        %v270 = vsel %vm268, %v266, 0.0
        %v271 = vsel %vm268, %v267, 0.0
        %v274 = vrot.slane %v241, 7
        %v275 = vrot.slane %v242, 7
        %v276 = vsel %vm245, %v274, %v275
        %v279 = vsel %vm245, 0.0, %v274
        %v280 = vsel %vm245, %v275, 0.0
        %283 = vrot.lane.b32.xlu0 %v279, 1
        %v284 = vpop.permute.xlu0 %283
        %285 = vrot.lane.b32.xlu0 %v276, 1
        %v286 = vpop.permute.xlu0 %285
        %287 = vrot.lane.b32.xlu0 %v280, 1
        %v288 = vpop.permute.xlu0 %287
        %v292 = vsel %vm264, 0.0, %v284
        %v293 = vsel %vm264, 0.0, %v286
        %v294 = vsel %vm264, 0.0, %v288
        %v295 = vsel %vm268, %v292, 0.0
        %v296 = vsel %vm268, %v293, 0.0
        %v297 = vsel %vm268, %v294, 0.0
        %s298 = sld [smem:[#allocation2]]
        %v299 = vstv %s298
        %v300 = vadd.f32 %v299, 0.0
        %s301 = sld [smem:[#allocation7]]
        %s302 = sld [smem:[#allocation7 + $0x9]]
        %v303 = vstv %s301
        %v304 = vmul.f32 %v303, %v269
        %v305 = vmul.f32 %v303, %v270
        %v306 = vadd.f32 %v300, %v304
        %v307 = vadd.f32 %v300, %v305
        %v308 = vstv %s302
        %v309 = vmul.f32 %v308, %v295
        %v310 = vmul.f32 %v308, %v296
        %v311 = vadd.f32 %v306, %v309
        %v312 = vadd.f32 %v307, %v310
        %s313 = sld [smem:[#allocation7 + $0x1]]
        %s314 = sld [smem:[#allocation7 + $0xa]]
        %v315 = vstv %s313
        %v316 = vmul.f32 %v315, %v269
        %v317 = vmul.f32 %v315, %v270
        %320 = vrot.lane.b32.xlu0 %v316, 127
        %v321 = vpop.permute.xlu0 %320
        %322 = vrot.lane.b32.xlu0 %v317, 127
        %v323 = vpop.permute.xlu0 %322
        %v326 = vadd.f32 %v311, %v321
        %v327 = vadd.f32 %v312, %v323
        %v328 = vstv %s314
        %v329 = vmul.f32 %v328, %v295
        %v330 = vmul.f32 %v328, %v296
        %333 = vrot.lane.b32.xlu0 %v329, 127
        %v334 = vpop.permute.xlu0 %333
        %335 = vrot.lane.b32.xlu0 %v330, 127
        %v336 = vpop.permute.xlu0 %335
        %v339 = vadd.f32 %v326, %v334
        %v340 = vadd.f32 %v327, %v336
        %s341 = sld [smem:[#allocation7 + $0x2]]
        %s342 = sld [smem:[#allocation7 + $0xb]]
        %v343 = vstv %s341
        %v344 = vmul.f32 %v343, %v269
        %v345 = vmul.f32 %v343, %v270
        %348 = vrot.lane.b32.xlu0 %v344, 126
        %v349 = vpop.permute.xlu0 %348
        %350 = vrot.lane.b32.xlu0 %v345, 126
        %v351 = vpop.permute.xlu0 %350
        %v354 = vadd.f32 %v339, %v349
        %v355 = vadd.f32 %v340, %v351
        %v356 = vstv %s342
        %v357 = vmul.f32 %v356, %v295
        %v358 = vmul.f32 %v356, %v296
        %361 = vrot.lane.b32.xlu0 %v357, 126
        %v362 = vpop.permute.xlu0 %361
        %363 = vrot.lane.b32.xlu0 %v358, 126
        %v364 = vpop.permute.xlu0 %363
        %v367 = vadd.f32 %v354, %v362
        %v368 = vadd.f32 %v355, %v364
        %s369 = sld [smem:[#allocation7 + $0x3]]
        %s370 = sld [smem:[#allocation7 + $0xc]]
        %v371 = vstv %s369
        %v372 = vmul.f32 %v371, %v269
        %v373 = vmul.f32 %v371, %v270
        %v374 = vmul.f32 %v371, %v271
        %vm378 = vcmask 1046528
        %v379 = vrot.slane %v372, 1
        %v380 = vrot.slane %v373, 1
        %v381 = vsel %vm378, %v379, %v380
        %v382 = vrot.slane %v374, 1
        %v383 = vsel %vm378, %v380, %v382
        %v386 = vadd.f32 %v367, %v381
        %v387 = vadd.f32 %v368, %v383
        %v388 = vstv %s370
        %v389 = vmul.f32 %v388, %v295
        %v390 = vmul.f32 %v388, %v296
        %v391 = vmul.f32 %v388, %v297
        %v395 = vrot.slane %v389, 1
        %v396 = vrot.slane %v390, 1
        %v397 = vsel %vm378, %v395, %v396
        %v398 = vrot.slane %v391, 1
        %v399 = vsel %vm378, %v396, %v398
        %v402 = vadd.f32 %v386, %v397
        %v403 = vadd.f32 %v387, %v399
        %s404 = sld [smem:[#allocation7 + $0x4]]
        %s405 = sld [smem:[#allocation7 + $0xd]]
        %v406 = vstv %s404
        %v407 = vmul.f32 %v406, %v269
        %v408 = vmul.f32 %v406, %v270
        %v409 = vmul.f32 %v406, %v271
        %v413 = vrot.slane %v407, 1
        %v414 = vrot.slane %v408, 1
        %v415 = vsel %vm378, %v413, %v414
        %v416 = vrot.slane %v409, 1
        %v417 = vsel %vm378, %v414, %v416
        %418 = vrot.lane.b32.xlu0 %v415, 127
        %v419 = vpop.permute.xlu0 %418
        %420 = vrot.lane.b32.xlu0 %v417, 127
        %v421 = vpop.permute.xlu0 %420
        %v424 = vadd.f32 %v402, %v419
        %v425 = vadd.f32 %v403, %v421
        %v426 = vstv %s405
        %v427 = vmul.f32 %v426, %v295
        %v428 = vmul.f32 %v426, %v296
        %v429 = vmul.f32 %v426, %v297
        %v433 = vrot.slane %v427, 1
        %v434 = vrot.slane %v428, 1
        %v435 = vsel %vm378, %v433, %v434
        %v436 = vrot.slane %v429, 1
        %v437 = vsel %vm378, %v434, %v436
        %438 = vrot.lane.b32.xlu0 %v435, 127
        %v439 = vpop.permute.xlu0 %438
        %440 = vrot.lane.b32.xlu0 %v437, 127
        %v441 = vpop.permute.xlu0 %440
        %v444 = vadd.f32 %v424, %v439
        %v445 = vadd.f32 %v425, %v441
        %s446 = sld [smem:[#allocation7 + $0x5]]
        %s447 = sld [smem:[#allocation7 + $0xe]]
        %v448 = vstv %s446
        %v449 = vmul.f32 %v448, %v269
        %v450 = vmul.f32 %v448, %v270
        %v451 = vmul.f32 %v448, %v271
        %v455 = vrot.slane %v449, 1
        %v456 = vrot.slane %v450, 1
        %v457 = vsel %vm378, %v455, %v456
        %v458 = vrot.slane %v451, 1
        %v459 = vsel %vm378, %v456, %v458
        %460 = vrot.lane.b32.xlu0 %v457, 126
        %v461 = vpop.permute.xlu0 %460
        %462 = vrot.lane.b32.xlu0 %v459, 126
        %v463 = vpop.permute.xlu0 %462
        %v466 = vadd.f32 %v444, %v461
        %v467 = vadd.f32 %v445, %v463
        %v468 = vstv %s447
        %v469 = vmul.f32 %v468, %v295
        %v470 = vmul.f32 %v468, %v296
        %v471 = vmul.f32 %v468, %v297
        %v475 = vrot.slane %v469, 1
        %v476 = vrot.slane %v470, 1
        %v477 = vsel %vm378, %v475, %v476
        %v478 = vrot.slane %v471, 1
        %v479 = vsel %vm378, %v476, %v478
        %480 = vrot.lane.b32.xlu0 %v477, 126
        %v481 = vpop.permute.xlu0 %480
        %482 = vrot.lane.b32.xlu0 %v479, 126
        %v483 = vpop.permute.xlu0 %482
        %v486 = vadd.f32 %v466, %v481
        %v487 = vadd.f32 %v467, %v483
        %s488 = sld [smem:[#allocation7 + $0x6]]
        %s489 = sld [smem:[#allocation7 + $0xf]]
        %v490 = vstv %s488
        %v491 = vmul.f32 %v490, %v269
        %v492 = vmul.f32 %v490, %v270
        %v493 = vmul.f32 %v490, %v271
        %vm497 = vcmask 1045504
        %v498 = vrot.slane %v491, 2
        %v499 = vrot.slane %v492, 2
        %v500 = vsel %vm497, %v498, %v499
        %v501 = vrot.slane %v493, 2
        %v502 = vsel %vm497, %v499, %v501
        %v505 = vadd.f32 %v486, %v500
        %v506 = vadd.f32 %v487, %v502
        %v507 = vstv %s489
        %v508 = vmul.f32 %v507, %v295
        %v509 = vmul.f32 %v507, %v296
        %v510 = vmul.f32 %v507, %v297
        %v514 = vrot.slane %v508, 2
        %v515 = vrot.slane %v509, 2
        %v516 = vsel %vm497, %v514, %v515
        %v517 = vrot.slane %v510, 2
        %v518 = vsel %vm497, %v515, %v517
        %v521 = vadd.f32 %v505, %v516
        %v522 = vadd.f32 %v506, %v518
        %s523 = sld [smem:[#allocation7 + $0x7]]
        %s524 = sld [smem:[#allocation7 + $0x10]]
        %v525 = vstv %s523
        %v526 = vmul.f32 %v525, %v269
        %v527 = vmul.f32 %v525, %v270
        %v528 = vmul.f32 %v525, %v271
        %v532 = vrot.slane %v526, 2
        %v533 = vrot.slane %v527, 2
        %v534 = vsel %vm497, %v532, %v533
        %v535 = vrot.slane %v528, 2
        %v536 = vsel %vm497, %v533, %v535
        %537 = vrot.lane.b32.xlu0 %v534, 127
        %v538 = vpop.permute.xlu0 %537
        %539 = vrot.lane.b32.xlu0 %v536, 127
        %v540 = vpop.permute.xlu0 %539
        %v543 = vadd.f32 %v521, %v538
        %v544 = vadd.f32 %v522, %v540
        %v545 = vstv %s524
        %v546 = vmul.f32 %v545, %v295
        %v547 = vmul.f32 %v545, %v296
        %v548 = vmul.f32 %v545, %v297
        %v552 = vrot.slane %v546, 2
        %v553 = vrot.slane %v547, 2
        %v554 = vsel %vm497, %v552, %v553
        %v555 = vrot.slane %v548, 2
        %v556 = vsel %vm497, %v553, %v555
        %557 = vrot.lane.b32.xlu0 %v554, 127
        %v558 = vpop.permute.xlu0 %557
        %559 = vrot.lane.b32.xlu0 %v556, 127
        %v560 = vpop.permute.xlu0 %559
        %v563 = vadd.f32 %v543, %v558
        %v564 = vadd.f32 %v544, %v560
        %s565 = sld [smem:[#allocation7 + $0x8]]
        %s566 = sld [smem:[#allocation7 + $0x11]]
        %v567 = vstv %s565
        %v568 = vmul.f32 %v567, %v269
        %v569 = vmul.f32 %v567, %v270
        %v570 = vmul.f32 %v567, %v271
        %v574 = vrot.slane %v568, 2
        %v575 = vrot.slane %v569, 2
        %v576 = vsel %vm497, %v574, %v575
        %v577 = vrot.slane %v570, 2
        %v578 = vsel %vm497, %v575, %v577
        %579 = vrot.lane.b32.xlu0 %v576, 126
        %v580 = vpop.permute.xlu0 %579
        %581 = vrot.lane.b32.xlu0 %v578, 126
        %v582 = vpop.permute.xlu0 %581
        %v585 = vadd.f32 %v563, %v580
        %v586 = vadd.f32 %v564, %v582
        %v587 = vstv %s566
        %v588 = vmul.f32 %v587, %v295
        %v589 = vmul.f32 %v587, %v296
        %v590 = vmul.f32 %v587, %v297
        %v594 = vrot.slane %v588, 2
        %v595 = vrot.slane %v589, 2
        %v596 = vsel %vm497, %v594, %v595
        %v597 = vrot.slane %v590, 2
        %v598 = vsel %vm497, %v595, %v597
        %599 = vrot.lane.b32.xlu0 %v596, 126
        %v600 = vpop.permute.xlu0 %599
        %601 = vrot.lane.b32.xlu0 %v598, 126
        %v602 = vpop.permute.xlu0 %601
        %v605 = vadd.f32 %v585, %v600
        %v606 = vadd.f32 %v586, %v602
        %v607 = vxor.u32 %v605, 2147483648
        %v608 = vxor.u32 %v606, 2147483648
        %v609 = vmul.f32 %v607, 1.442695
        %v610 = vpow.pop %v609
        %v611 = vmul.f32 %v608, 1.442695
        %v612 = vpow.pop %v611
        %v613 = vadd.f32 %v610, 1.0
        %v614 = vadd.f32 %v612, 1.0
        %v615 = vrcp.pop %v613
        %v616 = vmul.f32 1.0, %v615
        %v617 = vrcp.pop %v614
        %v618 = vmul.f32 1.0, %v617
        %v619 = vmul.f32 %v204, %v616
        %v620 = vmul.f32 %v205, %v618
        %v621 = vmul.f32 %v206, %v616
        %v622 = vmul.f32 %v207, %v618
        %v623 = vmul.f32 %v208, %v616
        %v624 = vmul.f32 %v209, %v618
        %v625 = vmul.f32 %v210, %v616
        %v626 = vmul.f32 %v211, %v618
        %627 = vst.msk [vmem:[%s203] sm:$0xff] %vm212, %v619
        %628 = vst.msk [vmem:[%s203 + $0x8] sm:$0xff] %vm212, %v620
        %629 = vst.msk [vmem:[%s203 + $0x10] sm:$0xff] %vm212, %v621
        %630 = vst.msk [vmem:[%s203 + $0x18] sm:$0xff] %vm212, %v622
        %631 = vst.msk [vmem:[%s203 + $0x20] sm:$0xff] %vm212, %v623
        %632 = vst.msk [vmem:[%s203 + $0x28] sm:$0xff] %vm212, %v624
        %633 = vst.msk [vmem:[%s203 + $0x30] sm:$0xff] %vm212, %v625
        %634 = vst.msk [vmem:[%s203 + $0x38] sm:$0xff] %vm212, %v626
        %s635 = sand.u32 %s98, 1
        %s636 = scalar_lea.sflag [#allocation5], %s635
        %s637 = sand.u32 %s98, 1
        %s638 = smul.addr %s637, 64
        %s639 = scalar_lea.vmem [#allocation8], %s638
        // Predicated region
        $region41: #{tpu_custom_call.1} parent=31 // pred_check
          %p640 = pneg %p108
        $region42: #{tpu_custom_call.1} parent=31 // pred_check_branch
          %642 = sbr.rel (%p640) target = $region44
        $region43: #{tpu_custom_call.1} parent=31 // pred_region
          %s644 = ssub.s32 1024, 1024
          %645 = vsyncadd %s636, %s644
          %s646 = smul.addr %s22, 8
          %s647 = smul.addr %s646, 128
          %s648 = scalar_lea.hbm %s3, %s647
          %s649 = sshll.u32 %s639, 4
          %s650 = int_to_ptr.vmem [resolvable:$true] %s649
          %655 = dma.vmem_to_hbm [thread:$0]  %s650, 1024, %s648, %s636, 128, 128, 8
        $region44: #{tpu_custom_call.1} parent=31 // pred_fallthru
          _
      $region32: #{tpu_custom_call.1} parent=5 // pred_fallthru
        _
      %p656 = scmp.le.s32.totalorder 2, %s17
      // Predicated region
      $region45: #{tpu_custom_call.1} parent=5 // pred_check
        %p657 = pneg %p656
      $region46: #{tpu_custom_call.1} parent=5 // pred_check_branch
        %659 = sbr.rel (%p657) target = $region48
      $region47: #{tpu_custom_call.1} parent=5 // pred_region
        %s660 = ssub.s32 %s17, 2
        // Predicated region
        $region49: #{tpu_custom_call.1} parent=47 // pred_check
          %p661 = pneg %p114
        $region50: #{tpu_custom_call.1} parent=47 // pred_check_branch
          %663 = sbr.rel (%p661) target = $region52
        $region51: #{tpu_custom_call.1} parent=47 // pred_region
          %s664 = sand.u32 %s99, 1
          %s665 = scalar_lea.sflag [#allocation5], %s664
          %s666 = sand.u32 %s99, 1
          %s667 = smul.addr %s666, 64
          %s668 = scalar_lea.vmem [#allocation8], %s667
          %669 = dma.done %s665, 1024
        $region52: #{tpu_custom_call.1} parent=47 // pred_fallthru
          _
      $region48: #{tpu_custom_call.1} parent=5 // pred_fallthru
        _
    $region6: #{tpu_custom_call.1} parent=1 // loop_footer
      %s21 = sadd.s32 1, %s17
    $region7: #{tpu_custom_call.1} parent=1 // loop_footer_branch
      %16 = sbr.rel target = $region3
    $region8: #{tpu_custom_call.1} parent=1 // loop_exit
      _
    %670 = vsyncpa [#allocation4], 1
    %s671 = scalar_lea.sflag [#allocation4], 1
    %672 = vsyncpa %s671, 1
    %673 = vsyncpa [#allocation5], 1
    %s674 = scalar_lea.sflag [#allocation5], 1
    %675 = vsyncpa %s674, 1
    %676 = vsyncpa [#allocation6], 1
    %s677 = scalar_lea.sflag [#allocation6], 1
    %678 = vsyncpa %s677, 1

</llo_original>
